<compile_context>
chip_gen: v5e
topology: v5e:2x2
jax: 0.10.0
libtpu: 0.0.40
codegen_flags: <defaults>
</compile_context>

<pallas_src>
import math
from functools import partial

import jax
import jax.numpy as jnp
from jax.experimental import pallas as pl
from jax.experimental.pallas import tpu as pltpu


def _round_up(x: int, m: int) -> int:
    return ((x + m - 1) // m) * m


def _sublane_multiple(itemsize: int) -> int:
    # f32 -> 8, bf16 -> 16, int8/fp8 -> 32 (sub-32-bit dtypes pack along sublanes).
    return 8 * max(1, 4 // itemsize)


def _vmem_budget_bytes():
    """(vmem_limit_bytes, tile_sizing_budget) per TensorCore, generation aware."""
    try:
        cap = int(pltpu.get_tpu_info().vmem_capacity_bytes)
    except Exception:
        cap = 64 << 20  # conservative fallback: v7x per-core VMEM
    # ~96 MiB on 128 MiB parts (v5e/v6e), ~48 MiB on 64 MiB parts (v7x).
    limit = max(32 << 20, min(int(cap * 0.75), cap - (8 << 20)))
    budget = int(limit * 0.85)  # headroom for Mosaic internal scratch / alignment
    return limit, budget


# ---------------------------------------------------------------------------
# Kernels
# ---------------------------------------------------------------------------

def _embed_kernel_resident(x_ref, w_ref, b_ref, o_ref):
    # One (tm, K) x (K, N) tile: fused matmul + bias add, f32 MXU accumulation.
    acc = jnp.dot(x_ref[...], w_ref[...], preferred_element_type=jnp.float32)
    o_ref[...] = (acc + b_ref[...].astype(jnp.float32)).astype(o_ref.dtype)


def _embed_kernel_tiled(x_ref, w_ref, b_ref, o_ref, acc_ref):
    # (Mt, Nt, Kt) grid; K is a reduction axis ("arbitrary", last in the grid).
    @pl.when(pl.program_id(2) == 0)
    def _():
        acc_ref[...] = jnp.zeros_like(acc_ref)

    acc_ref[...] += jnp.dot(x_ref[...], w_ref[...],
                            preferred_element_type=jnp.float32)

    @pl.when(pl.program_id(2) == pl.num_programs(2) - 1)
    def _():
        o_ref[...] = (acc_ref[...] + b_ref[...].astype(jnp.float32)).astype(o_ref.dtype)


# ---------------------------------------------------------------------------
# Tile-size selection
# ---------------------------------------------------------------------------

def _choose_tm_resident(M, K, N_pad, itemsize, budget, sub, tm_max=1024):
    """Row tile for the resident-weight path, or None if the weight doesn't
    (usefully) fit.  Pallas double-buffers EVERY input by default -- including
    the constant-index weight/bias -- so account for 2x there as well."""
    resident = 2 * (K * N_pad + N_pad) * itemsize          # weight + bias, x2 buffers
    per_row = 2 * (K + N_pad) * itemsize                   # x tile + out tile, x2 buffers
    avail = budget - resident
    if avail < per_row * sub:
        return None                                        # weight doesn't fit -> tiled path
    tm = min(avail // per_row, tm_max)
    tm = (tm // sub) * sub
    if tm < 64 and M > 64:
        return None                                        # avoid overhead-dominated tiny tiles
    return max(sub, tm)


def _choose_tiled_shapes(M, K, N_pad, itemsize, budget, sub):
    """(tm, tn, tk) for the fallback 3-D grid.  tk == K means no K tiling."""
    def vmem_bytes(tm, tn, tk):
        # double-buffered x / w / bias / out tiles + one f32 accumulator
        return 2 * (tm * tk + tk * tn + tn + tm * tn) * itemsize + tm * tn * 4

    tm = min(_round_up(M, sub), 512)
    tn = min(N_pad, 512)
    tk = K
    while vmem_bytes(tm, tn, tk) > budget and tn > 128:
        tn = max(128, (tn // 2) // 128 * 128)
    while vmem_bytes(tm, tn, tk) > budget and tm > 128:
        tm = max(128, (tm // 2) // sub * sub)
    while vmem_bytes(tm, tn, tk) > budget and tk > 128:
        # x's lane (last) dim requires tk % 128 == 0 once K is tiled.
        tk = max(128, _round_up(tk // 2, 128))
    while vmem_bytes(tm, tn, tk) > budget and tm > sub:
        tm = max(sub, (tm // 2) // sub * sub)
    return tm, tn, tk


# ---------------------------------------------------------------------------
# Parameter prep + forward
# ---------------------------------------------------------------------------

def prepare_embedding_params(weight, bias, dtype=None):
    """One-time parameter prep (outside the forward hot path).

    weight: (latent_dim, input_dim) -- torch nn.Linear layout.
    dtype:  optional storage dtype (e.g. jnp.bfloat16); MXU still accumulates f32.
    Returns (w_kn (K, N_pad), bias_row (1, N_pad), latent_dim).
    """
    N, K = weight.shape
    if dtype is not None:
        weight = weight.astype(dtype)
        bias = bias.astype(dtype)
    w_kn = weight.T                              # one-time transpose
    b = bias
    if N % 128 != 0:                             # lane-pad only when actually needed
        N_pad = _round_up(N, 128)
        w_kn = jnp.pad(w_kn, ((0, 0), (0, N_pad - N)))
        b = jnp.pad(b, (0, N_pad - N))
    else:
        N_pad = N
    return w_kn, b.reshape(1, N_pad), N


@partial(jax.jit, static_argnames=("latent_dim",))
def input_embedding_forward(x, w_kn, b_row, *, latent_dim):
    """x: (B, S, input_dim); w_kn: (K, N_pad) pre-transposed (+padded); b_row: (1, N_pad)."""
    B, S, K = x.shape
    Kw, N_pad = w_kn.shape
    assert Kw == K, "weight / activation feature dims disagree"
    M = B * S
    itemsize = jnp.dtype(x.dtype).itemsize
    sub = _sublane_multiple(itemsize)
    limit, budget = _vmem_budget_bytes()

    x2d = x.reshape(M, K)                        # free view, no extra HBM pass

    tm = _choose_tm_resident(M, K, N_pad, itemsize, budget, sub)
    if tm is not None:
        # --- fast path: weight resident, 1-D grid over rows -----------------
        # v7x megacore: the row axis is sharded across 2 TCs; for large M keep
        # at least 2 row tiles so both cores get work (budget is per-core).
        if M >= 2048:
            tm = min(tm, _round_up(pl.cdiv(M, 2), sub))
        if tm >= M:
            tm = M                               # single tile == full dim (always legal)
        grid_m = pl.cdiv(M, tm)                  # ragged last tile -> Pallas masks it
        out2d = pl.pallas_call(
            _embed_kernel_resident,
            out_shape=jax.ShapeDtypeStruct((M, N_pad), x.dtype),
            grid=(grid_m,),
            in_specs=[
                pl.BlockSpec((tm, K), lambda i: (i, 0)),       # streamed activations
                pl.BlockSpec((K, N_pad), lambda i: (0, 0)),    # resident weight
                pl.BlockSpec((1, N_pad), lambda i: (0, 0)),    # resident bias
            ],
            out_specs=pl.BlockSpec((tm, N_pad), lambda i: (i, 0)),
            compiler_params=pltpu.CompilerParams(
                dimension_semantics=("parallel",),
                vmem_limit_bytes=limit,
            ),
            cost_estimate=pl.CostEstimate(
                flops=2 * M * K * N_pad,
                transcendentals=0,
                bytes_accessed=itemsize * (M * K + K * N_pad + N_pad + M * N_pad),
            ),
        )(x2d, w_kn, b_row)
    else:
        # --- fallback: weight too large to keep resident (earliest on v7x) --
        tm, tn, tk = _choose_tiled_shapes(M, K, N_pad, itemsize, budget, sub)
        if tk < K:
            # Zero-pad the reduction dim so ragged K tiles can't pollute the sum.
            K_pad = _round_up(K, tk)
            x2d = jnp.pad(x2d, ((0, 0), (0, K_pad - K)))
            w_kn = jnp.pad(w_kn, ((0, K_pad - K), (0, 0)))
            K = K_pad
        if tm >= M:
            tm = M
        grid = (pl.cdiv(M, tm), pl.cdiv(N_pad, tn), pl.cdiv(K, tk))
        out2d = pl.pallas_call(
            _embed_kernel_tiled,
            out_shape=jax.ShapeDtypeStruct((M, N_pad), x.dtype),
            grid=grid,
            in_specs=[
                pl.BlockSpec((tm, tk), lambda i, j, k: (i, k)),
                pl.BlockSpec((tk, tn), lambda i, j, k: (k, j)),
                pl.BlockSpec((1, tn), lambda i, j, k: (0, j)),
            ],
            out_specs=pl.BlockSpec((tm, tn), lambda i, j, k: (i, j)),
            scratch_shapes=[pltpu.VMEM((tm, tn), jnp.float32)],
            compiler_params=pltpu.CompilerParams(
                dimension_semantics=("parallel", "parallel", "arbitrary"),
                vmem_limit_bytes=limit,
            ),
            cost_estimate=pl.CostEstimate(
                flops=2 * M * K * N_pad,
                transcendentals=0,
                bytes_accessed=itemsize * (M * K * grid[1] + K * N_pad + N_pad + M * N_pad),
            ),
        )(x2d, w_kn, b_row)

    if N_pad != latent_dim:
        out2d = out2d[:, :latent_dim]            # only when lane padding was needed
    # Dropout is identity in eval mode (see TODO above).
    return out2d.reshape(B, S, latent_dim)


def init_linear_params(key, input_dim, latent_dim, dtype=jnp.float32):
    """Deterministic init matching nn.Linear's default (kaiming-uniform-ish)."""
    k_w, k_b = jax.random.split(key)
    bound = 1.0 / math.sqrt(input_dim)
    weight = jax.random.uniform(
        k_w, (latent_dim, input_dim), dtype=dtype, minval=-bound, maxval=bound
    )
    bias = jax.random.uniform(
        k_b, (latent_dim,), dtype=dtype, minval=-bound, maxval=bound
    )
    return weight, bias


if __name__ == "__main__":
    key = jax.random.PRNGKey(0)
    k_x, k_p = jax.random.split(key)

    batch, seq, input_dim, latent_dim = 2, 8, 32, 64

    x = jax.random.normal(k_x, (batch, seq, input_dim), dtype=jnp.float32)
    weight, bias = init_linear_params(k_p, input_dim, latent_dim)

    # One-time parameter prep (transpose + optional lane padding) -- off the hot path.
    w_kn, b_row, n_out = prepare_embedding_params(weight, bias)

    out = input_embedding_forward(x, w_kn, b_row, latent_dim=n_out)
    out = jax.block_until_ready(out)

    # Reference: same math as torch (x @ W.T + b; dropout = identity in eval mode).
    ref = x @ weight.T + bias
    assert out.shape == (batch, seq, latent_dim)
    assert jnp.allclose(out, ref, atol=1e-5, rtol=1e-5)

    print("KERNEL_OK")
</pallas_src>

<mosaic_0001>
module attributes {stable_mosaic.version = 11 : i64} {
  func.func @_embed_kernel_resident(%arg0: i32, %arg1: memref<16x32xf32, #tpu.memory_space<vmem>>, %arg2: memref<32x128xf32, #tpu.memory_space<vmem>>, %arg3: memref<1x128xf32, #tpu.memory_space<vmem>>, %arg4: memref<16x128xf32, #tpu.memory_space<vmem>>) attributes {dimension_semantics = [#tpu.dimension_semantics<parallel>], iteration_bounds = array<i64: 1>, scalar_prefetch = 0 : i64, scratch_operands = 0 : i64, tpu.core_type = #tpu.core_type<tc>, window_params = [{transform_indices = @transform_0, window_bounds = array<i64: 16, 32>}, {pipeline_mode = #tpu.pipeline_mode<synchronous>, transform_indices = @transform_1, window_bounds = array<i64: 32, 128>}, {pipeline_mode = #tpu.pipeline_mode<synchronous>, transform_indices = @transform_2, window_bounds = array<i64: 1, 128>}, {transform_indices = @transform_3, window_bounds = array<i64: 16, 128>}]} {
    %c0 = arith.constant 0 : index
    %c0_0 = arith.constant 0 : index
    %0 = vector.load %arg1[%c0, %c0_0] : memref<16x32xf32, #tpu.memory_space<vmem>>, vector<16x32xf32>
    %c0_1 = arith.constant 0 : index
    %c0_2 = arith.constant 0 : index
    %1 = vector.load %arg2[%c0_1, %c0_2] : memref<32x128xf32, #tpu.memory_space<vmem>>, vector<32x128xf32>
    %cst = arith.constant dense<0.000000e+00> : vector<16x128xf32>
    %2 = tpu.matmul %0, %1, %cst {dimension_numbers = #tpu.dot_dimension_numbers<[1], [0], [0], [1], [0, 0, 1, 1], [], []>} : vector<16x32xf32>, vector<32x128xf32>, vector<16x128xf32> -> vector<16x128xf32>
    %c0_3 = arith.constant 0 : index
    %c0_4 = arith.constant 0 : index
    %3 = vector.load %arg3[%c0_3, %c0_4] : memref<1x128xf32, #tpu.memory_space<vmem>>, vector<1x128xf32>
    %4 = vector.broadcast %3 : vector<1x128xf32> to vector<16x128xf32>
    %5 = arith.addf %2, %4 : vector<16x128xf32>
    %c0_5 = arith.constant 0 : index
    %c0_6 = arith.constant 0 : index
    %6 = vector.load %arg4[%c0_5, %c0_6] : memref<16x128xf32, #tpu.memory_space<vmem>>, vector<16x128xf32>
    tpu.vector_store %arg4[%c0_5, %c0_6], %5 {strides = array<i32>} : memref<16x128xf32, #tpu.memory_space<vmem>>, vector<16x128xf32>,
    return
  }
  func.func @transform_0(%arg0: i32) -> (i32, i32) {
    %c0_i32 = arith.constant 0 : i32
    %c0_i32_0 = arith.constant 0 : i32
    return %arg0, %c0_i32 : i32, i32
  }
  func.func @transform_1(%arg0: i32) -> (i32, i32) {
    %c0_i32 = arith.constant 0 : i32
    %c0_i32_0 = arith.constant 0 : i32
    %c0_i32_1 = arith.constant 0 : i32
    return %c0_i32, %c0_i32_0 : i32, i32
  }
  func.func @transform_2(%arg0: i32) -> (i32, i32) {
    %c0_i32 = arith.constant 0 : i32
    %c0_i32_0 = arith.constant 0 : i32
    %c0_i32_1 = arith.constant 0 : i32
    return %c0_i32, %c0_i32_0 : i32, i32
  }
  func.func @transform_3(%arg0: i32) -> (i32, i32) {
    %c0_i32 = arith.constant 0 : i32
    %c0_i32_0 = arith.constant 0 : i32
    return %arg0, %c0_i32 : i32, i32
  }
}

</mosaic_0001>

<llo_original>
// kernel: input_embedding_forward.1
$region0: #{input_embedding_forward.1}
  #allocation0 [shape = 'u32[]', space=smem, size = 0x4, offset = 0x4, fixed_abs, tag = 'smem constant byte address 0x4 - core index']
  #allocation1 [shape = 'u32[72,128]{1,0:T(1,128)}', space=vmem, size = 0x9000, scoped, tag = 'internal scratch']
  %s0 = inlined_call_operand.hbm [shape: f32[16,32], index: 0, kind: input, shape index: {}]
  %s1 = inlined_call_operand.hbm [shape: f32[32,128], index: 1, kind: input, shape index: {}]
  %s2 = inlined_call_operand.vmem [shape: f32[1,128], index: 2, kind: input, shape index: {}]
  %s3 = inlined_call_operand.vmem [shape: f32[16,128], index: 3, kind: output, shape index: {}]
  %s4 = sld [smem:[#allocation0]]
  $region30: #{input_embedding_forward.1} parent=0
    _
  %s6 = ssub.s32 1, %s4
  %s7 = scalar_select 0, %s6, %s4
  $region1: #{input_embedding_forward.1} parent=0
    #allocation2 [shape = 'u8[8192]{0}', space=vmem, size = 0x2000, scoped, tag = 'input window, operand 0, single buffered']
    #allocation3 [shape = 's32[1]{0}', space=sflag, size = 0x4, scoped, tag = 'scoped memory for input_embedding_forward.1']
    #allocation4 [shape = 'u8[16384]{0}', space=vmem, size = 0x4000, scoped, tag = 'input window, operand 1, single buffered']
    #allocation5 [shape = 's32[1]{0}', space=sflag, size = 0x4, scoped, tag = 'scoped memory for input_embedding_forward.1']
    %8 = vsyncpa [#allocation3], 0
    %9 = vsyncpa [#allocation5], 0
    // Predicated region
    $region2: #{input_embedding_forward.1} parent=1 // pred_check
      _
    $region3: #{input_embedding_forward.1} parent=1 // pred_check_branch
      %11 = sbr.rel (0) target = $region5
    $region4: #{input_embedding_forward.1} parent=1 // pred_region
      %13 = vsyncadd [#allocation3], 0
      %s14 = sshll.u32 %s0, 4
      %s15 = int_to_ptr.hbm [resolvable:$true] %s14
      %s16 = sshll.u32 [#allocation2], 4
      %s17 = int_to_ptr.vmem [resolvable:$true] %s16
      %22 = dma.hbm_to_vmem [thread:$0]  %s15, 256, %s17, [#allocation3], 128, 128, 8
    $region5: #{input_embedding_forward.1} parent=1 // pred_fallthru
      _
    // Predicated region
    $region6: #{input_embedding_forward.1} parent=1 // pred_check
      _
    $region7: #{input_embedding_forward.1} parent=1 // pred_check_branch
      %24 = sbr.rel (0) target = $region9
    $region8: #{input_embedding_forward.1} parent=1 // pred_region
      %26 = vsyncadd [#allocation5], 0
      %s27 = sshll.u32 %s1, 4
      %s28 = int_to_ptr.hbm [resolvable:$true] %s27
      %s29 = sshll.u32 [#allocation4], 4
      %s30 = int_to_ptr.vmem [resolvable:$true] %s29
      %35 = dma.hbm_to_vmem [thread:$0]  %s28, 512, %s30, [#allocation5], 128, 128, 8
    $region9: #{input_embedding_forward.1} parent=1 // pred_fallthru
      _
    // Predicated region
    $region10: #{input_embedding_forward.1} parent=1 // pred_check
      _
    $region11: #{input_embedding_forward.1} parent=1 // pred_check_branch
      %37 = sbr.rel (0) target = $region13
    $region12: #{input_embedding_forward.1} parent=1 // pred_region
      _
    $region13: #{input_embedding_forward.1} parent=1 // pred_fallthru
      _
    // Predicated region
    $region14: #{input_embedding_forward.1} parent=1 // pred_check
      _
    $region15: #{input_embedding_forward.1} parent=1 // pred_check_branch
      %39 = sbr.rel (0) target = $region17
    $region16: #{input_embedding_forward.1} parent=1 // pred_region
      %41 = dma.done [#allocation3], 256
    $region17: #{input_embedding_forward.1} parent=1 // pred_fallthru
      _
    // Predicated region
    $region18: #{input_embedding_forward.1} parent=1 // pred_check
      _
    $region19: #{input_embedding_forward.1} parent=1 // pred_check_branch
      %43 = sbr.rel (0) target = $region21
    $region20: #{input_embedding_forward.1} parent=1 // pred_region
      %45 = dma.done [#allocation5], 512
    $region21: #{input_embedding_forward.1} parent=1 // pred_fallthru
      _
    %v46 = vld [vmem:[#allocation2] sm:$0xff]
    %v47 = vld [vmem:[#allocation2 + $0x8] sm:$0xff]
    %v48 = vld [vmem:[#allocation4] sm:$0xff]
    %v49 = vld [vmem:[#allocation4 + $0x8] sm:$0xff]
    %v50 = vld [vmem:[#allocation4 + $0x10] sm:$0xff]
    %v51 = vld [vmem:[#allocation4 + $0x18] sm:$0xff]
    %v52 = vld [vmem:[%s2] sm:$0x1]
    %v54 = vperm.slane %v52, 0
    %vm56 = vcmask 261120
    %v58 = vsel %vm56, %v46, 0
    %v61 = vsel %vm56, %v47, 0
    %63 = vmatpush.msra.mxu0 0.0
    %64 = vmatpush.msra.mxu0 0.0
    %65 = vmatpush.msra.mxu0 0.0
    %66 = vmatpush.msra.mxu0 0.0
    %67 = vmatpush.msra.mxu0 0.0
    %68 = vmatpush.msra.mxu0 0.0
    %69 = vmatpush.msra.mxu0 0.0
    %70 = vmatpush.msra.mxu0 0.0
    %71 = vmatpush.msra.mxu0 0.0
    %72 = vmatpush.msra.mxu0 0.0
    %73 = vmatpush.msra.mxu0 0.0
    %74 = vmatpush.msra.mxu0 0.0
    %75 = vmatpush.msra.mxu0 %v51
    %76 = vmatpush.msra.mxu0 %v50
    %77 = vmatpush.msra.mxu0 %v49
    %78 = vmatpush.msra.mxu0 %v48
    %79 = vmatmul.f32.gmra.mxu0 %v58
    %v80 = vpop.f32.mrf.mxu0
    %v81 = vadd.f32 %v54, %v80
    %82 = vmatmul.f32.gmra.mxu0 %v61
    %v83 = vpop.f32.mrf.mxu0
    %v84 = vadd.f32 %v54, %v83
    %85 = vdwg.mxu0
    %86 = vst [vmem:[%s3] sm:$0xff] %v81
    %87 = vst [vmem:[%s3 + $0x8] sm:$0xff] %v84
    // Predicated region
    $region22: #{input_embedding_forward.1} parent=1 // pred_check
      _
    $region23: #{input_embedding_forward.1} parent=1 // pred_check_branch
      %89 = sbr.rel (0) target = $region25
    $region24: #{input_embedding_forward.1} parent=1 // pred_region
      _
    $region25: #{input_embedding_forward.1} parent=1 // pred_fallthru
      _
    // Predicated region
    $region26: #{input_embedding_forward.1} parent=1 // pred_check
      _
    $region27: #{input_embedding_forward.1} parent=1 // pred_check_branch
      %91 = sbr.rel (0) target = $region29
    $region28: #{input_embedding_forward.1} parent=1 // pred_region
      _
    $region29: #{input_embedding_forward.1} parent=1 // pred_fallthru
      _
    %92 = vsyncpa [#allocation3], 1
    %93 = vsyncpa [#allocation5], 1

</llo_original>
